<compile_context>
chip_gen: v7x
topology: tpu7x:2x2x1
jax: 0.10.0
libtpu: 0.0.40
codegen_flags: <defaults>
</compile_context>

<pallas_src>
import functools

import jax
import jax.numpy as jnp
from jax.experimental import pallas as pl
from jax.experimental.pallas import tpu as pltpu


_LANES = 128
_MAX_BLOCK_ROWS = 2048  # (2048,128) f32 = 1 MiB/block; 2 inputs x 2 bufs = 4 MiB


def _sublane_multiple(dtype):
    """Required sublane multiple for a packed dtype (f32->8, bf16->16, int8->32)."""
    itemsize = jnp.dtype(dtype).itemsize
    return max(8, 32 // itemsize)


def _compose_sums_kernel(p_ref, g_ref, acc_ref, *, block_rows, valid_rows,
                         need_mask):
    """Accumulate lane-dense partial sums of [p*g, p+g, (p-g)^2].

    acc_ref is a (3, 8, 128) f32 VMEM output kept resident across the single
    'arbitrary' grid axis (same block index every step) and used as the
    accumulator.  Final scalar reduction happens in the JAX wrapper.
    """
    i = pl.program_id(0)

    @pl.when(i == 0)
    def _init():
        acc_ref[...] = jnp.zeros_like(acc_ref)

    p = p_ref[...].astype(jnp.float32)
    g = g_ref[...].astype(jnp.float32)

    if need_mask:
        # Zero BOTH p and g on rows past the true row count (partial last
        # block) before any arithmetic, so every accumulated quantity is
        # padding-neutral even if the padded region holds garbage.
        row_ids = jax.lax.broadcasted_iota(jnp.int32, p.shape, 0) + i * block_rows
        mask = row_ids < valid_rows
        zero = jnp.zeros_like(p)
        p = jnp.where(mask, p, zero)
        g = jnp.where(mask, g, zero)

    d = p - g

    def fold(x):
        # Group whole (8,128) tiles and sum them together: pure VPU vreg adds,
        # no cross-lane/XLU work in the hot loop.
        return jnp.sum(x.reshape(block_rows // 8, 8, _LANES), axis=0)

    acc_ref[0] += fold(p * g)   # -> sum(p * g)
    acc_ref[1] += fold(p + g)   # -> sum(p) + sum(g)
    acc_ref[2] += fold(d * d)   # -> sum((p - g)^2)


def _reduction_sums(pred, gt):
    """Run the Pallas kernel; returns a (3, 8, 128) f32 partial-sum block."""
    assert pred.shape == gt.shape
    n = pred.size
    flat_p = pred.reshape(-1)
    flat_g = gt.reshape(-1)

    pad = (-n) % _LANES
    if pad:
        # Tiny lane-alignment pad only (zeros are sum-neutral for all terms).
        flat_p = jnp.pad(flat_p, (0, pad))
        flat_g = jnp.pad(flat_g, (0, pad))

    rows = flat_p.size // _LANES
    p2 = flat_p.reshape(rows, _LANES)
    g2 = flat_g.reshape(rows, _LANES)

    mult = max(_sublane_multiple(p2.dtype), _sublane_multiple(g2.dtype))
    rows_rounded = ((rows + mult - 1) // mult) * mult
    block_rows = min(_MAX_BLOCK_ROWS, rows_rounded)
    num_blocks = pl.cdiv(rows, block_rows)
    need_mask = (rows % block_rows) != 0

    kernel = functools.partial(
        _compose_sums_kernel,
        block_rows=block_rows,
        valid_rows=rows,
        need_mask=need_mask,
    )

    bytes_accessed = (
        n * (jnp.dtype(pred.dtype).itemsize + jnp.dtype(gt.dtype).itemsize)
        + 3 * 8 * _LANES * 4
    )

    acc = pl.pallas_call(
        kernel,
        out_shape=jax.ShapeDtypeStruct((3, 8, _LANES), jnp.float32),
        grid=(num_blocks,),
        in_specs=[
            pl.BlockSpec((block_rows, _LANES), lambda i: (i, 0)),
            pl.BlockSpec((block_rows, _LANES), lambda i: (i, 0)),
        ],
        out_specs=pl.BlockSpec((3, 8, _LANES), lambda i: (0, 0, 0)),
        compiler_params=pltpu.CompilerParams(
            dimension_semantics=("arbitrary",),
        ),
        cost_estimate=pl.CostEstimate(
            flops=7 * n,
            transcendentals=0,
            bytes_accessed=bytes_accessed,
        ),
    )(p2, g2)
    return acc


@functools.partial(jax.jit, static_argnames=("reduction",))
def compose_loss(pred, gt, losses_weights, reduction="mean", eps=1.0):
    """JAX/Pallas equivalent of ComposeLoss([SoftDiceLoss(), MSELoss()], w).

    pred, gt: NCHW arrays (pred treated as probabilities, gt a binary mask).
    Returns a shape-(1,) float32 array (matching the torch.Tensor([0]) accum).
    """
    n_elems = pred.size
    acc = _reduction_sums(pred, gt)
    totals = jnp.sum(acc, axis=(1, 2))           # (3,)
    inter, pg_sum, sq_sum = totals[0], totals[1], totals[2]

    # Sub-loss 0: soft Dice loss (binary class).
    dice_loss = 1.0 - (2.0 * inter + eps) / (pg_sum + eps)
    # Sub-loss 1: MSE loss (mean over all elements).
    mse_loss = sq_sum / jnp.float32(n_elems)

    sub_losses = jnp.stack([dice_loss, mse_loss])
    w = jnp.asarray(losses_weights, dtype=jnp.float32)
    tloss = jnp.sum(sub_losses * w)

    if reduction == "mean":
        tloss = tloss / sub_losses.shape[0]
    return tloss[None]  # shape (1,)


def _reference(pred, gt, losses_weights, eps=1.0):
    """Pure-jnp reference for correctness checking."""
    p = pred.astype(jnp.float32)
    g = gt.astype(jnp.float32)
    inter = jnp.sum(p * g)
    dice = 1.0 - (2.0 * inter + eps) / (jnp.sum(p) + jnp.sum(g) + eps)
    mse = jnp.mean((p - g) ** 2)
    w = jnp.asarray(losses_weights, dtype=jnp.float32)
    tloss = w[0] * dice + w[1] * mse
    return (tloss / 2.0)[None]


if __name__ == "__main__":
    key = jax.random.PRNGKey(0)
    losses_weights = (0.5, 0.5)  # sums to 1 -> no warning in the PyTorch module

    # Case 1: lane-aligned NCHW shape (batch=2, channels=4, spatial=16x16).
    kp, kg, key = jax.random.split(key, 3)
    pred = jax.random.uniform(kp, (2, 4, 16, 16), dtype=jnp.float32)
    gt = jax.random.bernoulli(kg, 0.3, (2, 4, 16, 16)).astype(jnp.float32)

    out = jax.block_until_ready(compose_loss(pred, gt, losses_weights))
    ref = _reference(pred, gt, losses_weights)
    assert out.shape == (1,), out.shape
    assert jnp.allclose(out, ref, rtol=1e-5, atol=1e-6), (out, ref)

    # Case 2: non-aligned shape to exercise the in-kernel tail masking path.
    kp2, kg2, key = jax.random.split(key, 3)
    pred2 = jax.random.uniform(kp2, (2, 3, 15, 20), dtype=jnp.float32)
    gt2 = jax.random.bernoulli(kg2, 0.3, (2, 3, 15, 20)).astype(jnp.float32)

    out2 = jax.block_until_ready(compose_loss(pred2, gt2, losses_weights))
    ref2 = _reference(pred2, gt2, losses_weights)
    assert out2.shape == (1,), out2.shape
    assert jnp.allclose(out2, ref2, rtol=1e-5, atol=1e-6), (out2, ref2)

    print("KERNEL_OK")
</pallas_src>

<mosaic_0001>
module attributes {stable_mosaic.version = 11 : i64} {
  func.func @_compose_sums_kernel(%arg0: i32, %arg1: memref<16x128xf32, #tpu.memory_space<vmem>>, %arg2: memref<16x128xf32, #tpu.memory_space<vmem>>, %arg3: memref<3x8x128xf32, #tpu.memory_space<vmem>>) attributes {dimension_semantics = [#tpu.dimension_semantics<arbitrary>], iteration_bounds = array<i64: 1>, scalar_prefetch = 0 : i64, scratch_operands = 0 : i64, tpu.core_type = #tpu.core_type<tc>, window_params = [{transform_indices = @transform_0, window_bounds = array<i64: 16, 128>}, {transform_indices = @transform_1, window_bounds = array<i64: 16, 128>}, {pipeline_mode = #tpu.pipeline_mode<synchronous>, transform_indices = @transform_2, window_bounds = array<i64: 3, 8, 128>}]} {
    %c0_i32 = arith.constant 0 : i32
    %0 = arith.cmpi eq, %arg0, %c0_i32 : i32
    %1 = arith.extui %0 : i1 to i32
    %c0_i32_0 = arith.constant 0 : i32
    %2 = arith.cmpi ne, %1, %c0_i32_0 : i32
    scf.if %2 {
      %cst_22 = arith.constant 0.000000e+00 : f32
      %33 = vector.broadcast %cst_22 : f32 to vector<3x8x128xf32>
      %c0_23 = arith.constant 0 : index
      %c0_24 = arith.constant 0 : index
      %c0_25 = arith.constant 0 : index
      %34 = vector.load %arg3[%c0_23, %c0_24, %c0_25] : memref<3x8x128xf32, #tpu.memory_space<vmem>>, vector<3x8x128xf32>
      tpu.vector_store %arg3[%c0_23, %c0_24, %c0_25], %33 {strides = array<i32>} : memref<3x8x128xf32, #tpu.memory_space<vmem>>, vector<3x8x128xf32>,
    } else {
    }
    %c0 = arith.constant 0 : index
    %c0_1 = arith.constant 0 : index
    %3 = vector.load %arg1[%c0, %c0_1] : memref<16x128xf32, #tpu.memory_space<vmem>>, vector<16x128xf32>
    %c0_2 = arith.constant 0 : index
    %c0_3 = arith.constant 0 : index
    %4 = vector.load %arg2[%c0_2, %c0_3] : memref<16x128xf32, #tpu.memory_space<vmem>>, vector<16x128xf32>
    %5 = arith.subf %3, %4 : vector<16x128xf32>
    %c0_4 = arith.constant 0 : index
    %c0_5 = arith.constant 0 : index
    %c0_6 = arith.constant 0 : index
    %6 = vector.load %arg3[%c0_4, %c0_5, %c0_6] : memref<3x8x128xf32, #tpu.memory_space<vmem>>, vector<1x8x128xf32>
    %7 = vector.shape_cast %6 : vector<1x8x128xf32> to vector<8x128xf32>
    %8 = arith.mulf %3, %4 : vector<16x128xf32>
    %9 = vector.shape_cast %8 : vector<16x128xf32> to vector<2x8x128xf32>
    %cst = arith.constant dense<0.000000e+00> : vector<8x128xf32>
    %10 = vector.multi_reduction <add>, %9, %cst [0] : vector<2x8x128xf32> to vector<8x128xf32>
    %11 = arith.addf %7, %10 : vector<8x128xf32>
    %c0_7 = arith.constant 0 : index
    %c0_8 = arith.constant 0 : index
    %c0_9 = arith.constant 0 : index
    %12 = vector.load %arg3[%c0_7, %c0_8, %c0_9] : memref<3x8x128xf32, #tpu.memory_space<vmem>>, vector<1x8x128xf32>
    %13 = vector.shape_cast %12 : vector<1x8x128xf32> to vector<8x128xf32>
    %14 = vector.shape_cast %11 : vector<8x128xf32> to vector<1x8x128xf32>
    tpu.vector_store %arg3[%c0_7, %c0_8, %c0_9], %14 {strides = array<i32>} : memref<3x8x128xf32, #tpu.memory_space<vmem>>, vector<1x8x128xf32>,
    %c1 = arith.constant 1 : index
    %c0_10 = arith.constant 0 : index
    %c0_11 = arith.constant 0 : index
    %15 = vector.load %arg3[%c1, %c0_10, %c0_11] : memref<3x8x128xf32, #tpu.memory_space<vmem>>, vector<1x8x128xf32>
    %16 = vector.shape_cast %15 : vector<1x8x128xf32> to vector<8x128xf32>
    %17 = arith.addf %3, %4 : vector<16x128xf32>
    %18 = vector.shape_cast %17 : vector<16x128xf32> to vector<2x8x128xf32>
    %cst_12 = arith.constant dense<0.000000e+00> : vector<8x128xf32>
    %19 = vector.multi_reduction <add>, %18, %cst_12 [0] : vector<2x8x128xf32> to vector<8x128xf32>
    %20 = arith.addf %16, %19 : vector<8x128xf32>
    %c1_13 = arith.constant 1 : index
    %c0_14 = arith.constant 0 : index
    %c0_15 = arith.constant 0 : index
    %21 = vector.load %arg3[%c1_13, %c0_14, %c0_15] : memref<3x8x128xf32, #tpu.memory_space<vmem>>, vector<1x8x128xf32>
    %22 = vector.shape_cast %21 : vector<1x8x128xf32> to vector<8x128xf32>
    %23 = vector.shape_cast %20 : vector<8x128xf32> to vector<1x8x128xf32>
    tpu.vector_store %arg3[%c1_13, %c0_14, %c0_15], %23 {strides = array<i32>} : memref<3x8x128xf32, #tpu.memory_space<vmem>>, vector<1x8x128xf32>,
    %c2 = arith.constant 2 : index
    %c0_16 = arith.constant 0 : index
    %c0_17 = arith.constant 0 : index
    %24 = vector.load %arg3[%c2, %c0_16, %c0_17] : memref<3x8x128xf32, #tpu.memory_space<vmem>>, vector<1x8x128xf32>
    %25 = vector.shape_cast %24 : vector<1x8x128xf32> to vector<8x128xf32>
    %26 = arith.mulf %5, %5 : vector<16x128xf32>
    %27 = vector.shape_cast %26 : vector<16x128xf32> to vector<2x8x128xf32>
    %cst_18 = arith.constant dense<0.000000e+00> : vector<8x128xf32>
    %28 = vector.multi_reduction <add>, %27, %cst_18 [0] : vector<2x8x128xf32> to vector<8x128xf32>
    %29 = arith.addf %25, %28 : vector<8x128xf32>
    %c2_19 = arith.constant 2 : index
    %c0_20 = arith.constant 0 : index
    %c0_21 = arith.constant 0 : index
    %30 = vector.load %arg3[%c2_19, %c0_20, %c0_21] : memref<3x8x128xf32, #tpu.memory_space<vmem>>, vector<1x8x128xf32>
    %31 = vector.shape_cast %30 : vector<1x8x128xf32> to vector<8x128xf32>
    %32 = vector.shape_cast %29 : vector<8x128xf32> to vector<1x8x128xf32>
    tpu.vector_store %arg3[%c2_19, %c0_20, %c0_21], %32 {strides = array<i32>} : memref<3x8x128xf32, #tpu.memory_space<vmem>>, vector<1x8x128xf32>,
    return
  }
  func.func @transform_0(%arg0: i32) -> (i32, i32) {
    %c0_i32 = arith.constant 0 : i32
    %c0_i32_0 = arith.constant 0 : i32
    return %arg0, %c0_i32 : i32, i32
  }
  func.func @transform_1(%arg0: i32) -> (i32, i32) {
    %c0_i32 = arith.constant 0 : i32
    %c0_i32_0 = arith.constant 0 : i32
    return %arg0, %c0_i32 : i32, i32
  }
  func.func @transform_2(%arg0: i32) -> (i32, i32, i32) {
    %c0_i32 = arith.constant 0 : i32
    %c0_i32_0 = arith.constant 0 : i32
    %c0_i32_1 = arith.constant 0 : i32
    %c0_i32_2 = arith.constant 0 : i32
    return %c0_i32, %c0_i32_0, %c0_i32_1 : i32, i32, i32
  }
}

</mosaic_0001>

<llo_original>
// kernel: compose_loss.1
$region0: #{compose_loss.1}
  #allocation0 [shape = 'u32[]', space=smem, size = 0x4, offset = 0x4, fixed_abs, tag = 'smem constant byte address 0x4 - core index']
  #allocation1 [shape = 'u32[144,128]{1,0:T(1,128)}', space=vmem, size = 0x12000, scoped, tag = 'internal scratch']
  %s0 = inlined_call_operand.vmem [shape: f32[16,128], index: 0, kind: input, shape index: {}]
  %s1 = inlined_call_operand.vmem [shape: f32[16,128], index: 1, kind: input, shape index: {}]
  %s2 = inlined_call_operand.vmem [shape: f32[3,8,128], index: 2, kind: output, shape index: {}]
  %s3 = sld [smem:[#allocation0]]
  $region22: #{compose_loss.1} parent=0
    _
  %s5 = ssub.s32 1, %s3
  %s6 = scalar_select 0, %s5, %s3
  // Predicated region
  $region2: #{compose_loss.1} parent=0 // pred_check
    _
  $region3: #{compose_loss.1} parent=0 // pred_check_branch
    %8 = sbr.rel (0) target = $region5
  $region4: #{compose_loss.1} parent=0 // pred_region
    _
  $region5: #{compose_loss.1} parent=0 // pred_fallthru
    _
  // Predicated region
  $region6: #{compose_loss.1} parent=0 // pred_check
    _
  $region7: #{compose_loss.1} parent=0 // pred_check_branch
    %10 = sbr.rel (0) target = $region9
  $region8: #{compose_loss.1} parent=0 // pred_region
    _
  $region9: #{compose_loss.1} parent=0 // pred_fallthru
    _
  %p11 = scmp.eq.s32.totalorder 0, 0
  // Predicated region
  $region10: #{compose_loss.1} parent=0 // pred_check
    %p12 = pneg %p11
  $region11: #{compose_loss.1} parent=0 // pred_check_branch
    %14 = sbr.rel (%p12) target = $region13
  $region12: #{compose_loss.1} parent=0 // pred_region
    %15 = vst [vmem:[%s2] sm:$0xff] 0.0
    %16 = vst [vmem:[%s2 + $0x8] sm:$0xff] 0.0
    %17 = vst [vmem:[%s2 + $0x10] sm:$0xff] 0.0
  $region13: #{compose_loss.1} parent=0 // pred_fallthru
    _
  %v18 = vld [vmem:[%s0] sm:$0xff]
  %v19 = vld [vmem:[%s0 + $0x8] sm:$0xff]
  %v20 = vld [vmem:[%s1] sm:$0xff]
  %v21 = vld [vmem:[%s1 + $0x8] sm:$0xff]
  %v22 = vsub.f32 %v18, %v20
  %v23 = vsub.f32 %v19, %v21
  %v24 = vld [vmem:[%s2] sm:$0xff]
  %v25 = vmul.f32 %v18, %v20
  %v26 = vmul.f32 %v19, %v21
  %v27 = vadd.f32 %v25, %v26
  %v28 = vadd.f32 %v24, %v27
  %29 = vst [vmem:[%s2] sm:$0xff] %v28
  %s30 = scalar_lea.vmem %s2, 8
  %v31 = vld [vmem:[%s30] sm:$0xff]
  %v32 = vadd.f32 %v18, %v20
  %v33 = vadd.f32 %v19, %v21
  %v34 = vadd.f32 %v32, %v33
  %v35 = vadd.f32 %v31, %v34
  %36 = vst [vmem:[%s30] sm:$0xff] %v35
  %s37 = scalar_lea.vmem %s2, 16
  %v38 = vld [vmem:[%s37] sm:$0xff]
  %v39 = vmul.f32 %v22, %v22
  %v40 = vmul.f32 %v23, %v23
  %v41 = vadd.f32 %v39, %v40
  %v42 = vadd.f32 %v38, %v41
  %43 = vst [vmem:[%s37] sm:$0xff] %v42
  // Predicated region
  $region14: #{compose_loss.1} parent=0 // pred_check
    _
  $region15: #{compose_loss.1} parent=0 // pred_check_branch
    %45 = sbr.rel (0) target = $region17
  $region16: #{compose_loss.1} parent=0 // pred_region
    _
  $region17: #{compose_loss.1} parent=0 // pred_fallthru
    _
  // Predicated region
  $region18: #{compose_loss.1} parent=0 // pred_check
    _
  $region19: #{compose_loss.1} parent=0 // pred_check_branch
    %47 = sbr.rel (0) target = $region21
  $region20: #{compose_loss.1} parent=0 // pred_region
    _
  $region21: #{compose_loss.1} parent=0 // pred_fallthru
    _

</llo_original>
